<compile_context>
chip_gen: v5e
topology: v5e:2x2
jax: 0.10.0
libtpu: 0.0.40
codegen_flags: <defaults>
</compile_context>

<pallas_src>
import jax
import jax.numpy as jnp
from jax.experimental import pallas as pl
from jax.experimental.pallas import tpu as pltpu

LAMBD = 0.5                      # module default
_LANE = 128                      # lane width
_SUB = 8                         # f32 native sublane tile
_SUB_I8 = 32                     # int8 native sublane tile
_TILE_TARGET_BYTES = 4 << 20     # ~4 MiB of f32 target per row tile
_MAX_TH = 1024                   # hard cap on rows per tile
_HEADROOM = 12 << 20             # VMEM headroom for Mosaic internal scratch


def _round_up(x, m):
    return (x + m - 1) // m * m


def _cdiv(a, b):
    return -(-a // b)


def _interp_matrix(dst, src):
    """M (dst, src) s.t. M @ x == 1-D bilinear resize with align_corners=True."""
    if dst == 1:
        coords = jnp.zeros((1,), jnp.float32)
    else:
        coords = jnp.arange(dst, dtype=jnp.float32) * (src - 1) / (dst - 1)
    lo = jnp.clip(jnp.floor(coords).astype(jnp.int32), 0, src - 1)
    hi = jnp.clip(lo + 1, 0, src - 1)
    frac = coords - lo.astype(jnp.float32)
    return (jax.nn.one_hot(lo, src, dtype=jnp.float32) * (1.0 - frac)[:, None]
            + jax.nn.one_hot(hi, src, dtype=jnp.float32) * frac[:, None])


def _vmem_cap_bytes():
    """Physical-VMEM-aware cap for vmem_limit_bytes (v7x has only 64 MiB)."""
    cap = 64 << 20                                   # conservative default
    try:
        cap = int(getattr(pltpu.get_tpu_info(), "vmem_capacity_bytes", cap))
    except Exception:
        pass
    return max(cap - (16 << 20), 24 << 20)           # leave Mosaic headroom


def _vmem_need_bytes(TH, W, h, w):
    """Double-buffered input/output blocks + materialized kernel temporaries."""
    W_l = _round_up(W, _LANE)
    h_l, w_l = _round_up(h, _LANE), _round_up(w, _LANE)
    h_s, w_s = _round_up(h, _SUB), _round_up(w, _SUB)
    TH_s, TH_i8 = _round_up(TH, _SUB), _round_up(TH, _SUB_I8)
    return (2 * TH_s * W_l * 4        # target f32 tiles
            + 2 * TH_i8 * W_l         # mask int8 tiles
            + 2 * h_s * w_l * 4       # pred block
            + 2 * TH_s * h_l * 4      # row-interp rows (A tile)
            + 2 * w_s * W_l * 4       # col-interp matrix (B^T)
            + 2 * 8 * W_l * 4         # output block
            + h_s * W_l * 4           # pred @ B^T intermediate
            + 3 * TH_s * W_l * 4)     # up / select / diff live temporaries


def _make_kernel(H, TH, row_guard):
    def kernel(pred_ref, tgt_ref, mask_ref, a_ref, bt_ref, out_ref):
        r = pl.program_id(1)

        # Separable align_corners=True bilinear upsample on the MXU:
        #   up = A[tile rows] @ (pred @ B^T).  Recomputed per tile (cheap) so
        #   there is no cross-tile state and both grid axes stay parallel.
        col = jnp.dot(pred_ref[0], bt_ref[...],
                      preferred_element_type=jnp.float32)          # (h, W)
        up = jnp.dot(a_ref[...], col,
                     preferred_element_type=jnp.float32)           # (TH, W)

        valid = mask_ref[0] != 0                                   # (TH, W)
        if row_guard:
            # Last row tile overhangs H: mask out the garbage rows.
            rows = jax.lax.broadcasted_iota(jnp.int32, (TH, 1), 0) + r * TH
            valid = jnp.logical_and(valid, rows < H)

        # Invalid / out-of-bounds pixels -> t = p = 1 -> diff = log(1) = 0,
        # so no extra select is needed after the (single) log.
        t_safe = jnp.where(valid, tgt_ref[0], 1.0)
        p_safe = jnp.where(valid, up, 1.0)
        diff = jnp.log(t_safe / p_safe)                            # (TH, W)

        # Lane-wise (per-column) partial sums: cheap sublane reduce only; the
        # cross-lane reduction happens once, outside the kernel.
        out_ref[0, 0, 0:1, :] = jnp.sum(diff, axis=0, keepdims=True)
        out_ref[0, 0, 1:2, :] = jnp.sum(diff * diff, axis=0, keepdims=True)
        out_ref[0, 0, 2:3, :] = jnp.sum(valid.astype(jnp.float32), axis=0,
                                        keepdims=True)
    return kernel


def silog_loss(pred, target, valid_mask, lambd=LAMBD, tile_rows=None):
    B, h, w = pred.shape
    H, W = valid_mask.shape[-2], valid_mask.shape[-1]

    # --- row tiling: big tiles to amortize per-step overhead, shrunk until
    #     they fit the physical-VMEM-aware budget (v7x: 64 MiB). -------------
    cap = _vmem_cap_bytes()
    W_l = _round_up(W, _LANE)
    th = _TILE_TARGET_BYTES // (4 * W_l)
    th = min(_MAX_TH, max(_SUB_I8, th // _SUB_I8 * _SUB_I8))
    if tile_rows is not None:                 # test hook / manual override
        th = max(_SUB_I8, tile_rows // _SUB_I8 * _SUB_I8)
    if th >= H:
        TH = H                                # single full-dim row tile
    else:
        TH = th
        while TH > _SUB_I8 and _vmem_need_bytes(TH, W, h, w) + _HEADROOM > cap:
            TH = max(_SUB_I8, (TH // 2) // _SUB_I8 * _SUB_I8)
    num_tiles = _cdiv(H, TH)
    row_guard = (H % TH) != 0

    need = _vmem_need_bytes(TH, W, h, w)
    vmem_limit = int(min(need + _HEADROOM, cap))

    # --- inputs: no padded f32 copy of target (dominant HBM stream). --------
    pred = pred.astype(jnp.float32)
    tgt = jnp.squeeze(target, axis=-1)        # (B, H, W); squeeze is a bitcast
    if tgt.dtype != jnp.float32:
        tgt = tgt.astype(jnp.float32)
    mask_i8 = valid_mask.astype(jnp.int8)     # 1 B/px HBM stream

    # Interpolation matrices (tiny). A is zero-padded to num_tiles*TH rows so
    # every (TH, h) block is in-bounds; B^T needs no padding (W is full-dim).
    a_mat = _interp_matrix(H, h)              # (H, h)
    H_rows = num_tiles * TH
    if H_rows > H:
        a_mat = jnp.pad(a_mat, ((0, H_rows - H), (0, 0)))
    bt_mat = _interp_matrix(W, w).T           # (w, W)

    kernel = _make_kernel(H, TH, row_guard)

    partials = pl.pallas_call(
        kernel,
        out_shape=jax.ShapeDtypeStruct((B, num_tiles, 3, W), jnp.float32),
        grid_spec=pltpu.PrefetchScalarGridSpec(
            num_scalar_prefetch=0,
            grid=(B, num_tiles),
            in_specs=[
                pl.BlockSpec((1, h, w), lambda b, r: (b, 0, 0)),    # pred
                pl.BlockSpec((1, TH, W), lambda b, r: (b, r, 0)),   # target f32
                pl.BlockSpec((1, TH, W), lambda b, r: (b, r, 0)),   # mask int8
                pl.BlockSpec((TH, h), lambda b, r: (r, 0)),         # A rows
                pl.BlockSpec((w, W), lambda b, r: (0, 0)),          # B^T
            ],
            out_specs=pl.BlockSpec((1, 1, 3, W), lambda b, r: (b, r, 0, 0)),
        ),
        compiler_params=pltpu.CompilerParams(
            dimension_semantics=("parallel", "parallel"),
            vmem_limit_bytes=vmem_limit,
        ),
    )(pred, tgt, mask_i8, a_mat, bt_mat)

    # --- final combine (tiny) outside the kernel ----------------------------
    sum_d = jnp.sum(partials[:, :, 0, :])
    sum_d2 = jnp.sum(partials[:, :, 1, :])
    n = jnp.maximum(jnp.sum(partials[:, :, 2, :]), 1.0)   # guard: 0 valid px
    mean = sum_d / n
    var = jnp.maximum(sum_d2 / n - lambd * mean * mean, 0.0)  # clamp fp cancel
    return jnp.sqrt(var)


def silog_loss_ref(pred, target, valid_mask, lambd=LAMBD):
    """Pure-JAX reference mirroring the torch module semantics."""
    B, h, w = pred.shape
    H, W = valid_mask.shape[-2], valid_mask.shape[-1]
    a_mat = _interp_matrix(H, h)
    b_mat = _interp_matrix(W, w)
    up = jnp.einsum('Hh,bhw,Ww->bHW', a_mat, pred.astype(jnp.float32), b_mat)
    tgt = jnp.squeeze(target, axis=-1).astype(jnp.float32)
    diff = jnp.where(valid_mask,
                     jnp.log(jnp.where(valid_mask, tgt, 1.0))
                     - jnp.log(jnp.where(valid_mask, up, 1.0)), 0.0)
    n = jnp.sum(valid_mask).astype(jnp.float32)
    mean = jnp.sum(diff) / n
    mean_sq = jnp.sum(diff * diff) / n
    return jnp.sqrt(mean_sq - lambd * mean * mean)


if __name__ == "__main__":
    key = jax.random.PRNGKey(0)

    # Case 1: small shapes (single row tile, non-aligned H/W).
    k1, k2, k3, k4, k5, k6 = jax.random.split(key, 6)
    B, h, w = 2, 8, 8            # low-res prediction
    H, W = 20, 30                # valid_mask / target resolution
    pred = jax.random.uniform(k1, (B, h, w), jnp.float32, minval=0.5, maxval=2.0)
    target = jax.random.uniform(k2, (B, H, W, 1), jnp.float32, minval=0.5, maxval=2.0)
    valid_mask = jax.random.uniform(k3, (B, H, W)) < 0.7

    loss = jax.block_until_ready(silog_loss(pred, target, valid_mask))
    ref = jax.block_until_ready(silog_loss_ref(pred, target, valid_mask))
    assert jnp.isfinite(loss), ("non-finite loss", loss)
    assert jnp.allclose(loss, ref, rtol=2e-4, atol=1e-5), (loss, ref)

    # Case 2: forced small row tiles -> multi-tile path with row overhang.
    B2, h2, w2 = 2, 9, 13
    H2, W2 = 80, 160             # 3 tiles of 32 rows, last tile overhangs
    pred2 = jax.random.uniform(k4, (B2, h2, w2), jnp.float32, minval=0.5, maxval=2.0)
    target2 = jax.random.uniform(k5, (B2, H2, W2, 1), jnp.float32, minval=0.5, maxval=2.0)
    valid2 = jax.random.uniform(k6, (B2, H2, W2)) < 0.7

    loss2 = jax.block_until_ready(silog_loss(pred2, target2, valid2, tile_rows=32))
    ref2 = jax.block_until_ready(silog_loss_ref(pred2, target2, valid2))
    assert jnp.isfinite(loss2), ("non-finite loss", loss2)
    assert jnp.allclose(loss2, ref2, rtol=2e-4, atol=1e-5), (loss2, ref2)

    print("KERNEL_OK")
</pallas_src>

<mosaic_0001>
module attributes {stable_mosaic.version = 11 : i64} {
  func.func @kernel(%arg0: i32, %arg1: i32, %arg2: memref<1x8x8xf32, #tpu.memory_space<vmem>>, %arg3: memref<1x20x30xf32, #tpu.memory_space<vmem>>, %arg4: memref<1x20x30xi8, #tpu.memory_space<vmem>>, %arg5: memref<20x8xf32, #tpu.memory_space<vmem>>, %arg6: memref<8x30xf32, #tpu.memory_space<vmem>>, %arg7: memref<1x1x3x30xf32, #tpu.memory_space<vmem>>) attributes {dimension_semantics = [#tpu.dimension_semantics<parallel>, #tpu.dimension_semantics<parallel>], iteration_bounds = array<i64: 2, 1>, scalar_prefetch = 0 : i64, scratch_operands = 0 : i64, tpu.core_type = #tpu.core_type<tc>, window_params = [{transform_indices = @transform_0, window_bounds = array<i64: 1, 8, 8>}, {transform_indices = @transform_1, window_bounds = array<i64: 1, 20, 30>}, {transform_indices = @transform_2, window_bounds = array<i64: 1, 20, 30>}, {transform_indices = @transform_3, window_bounds = array<i64: 20, 8>}, {pipeline_mode = #tpu.pipeline_mode<synchronous>, transform_indices = @transform_4, window_bounds = array<i64: 8, 30>}, {transform_indices = @transform_5, window_bounds = array<i64: 1, 1, 3, 30>}]} {
    %c0 = arith.constant 0 : index
    %c0_0 = arith.constant 0 : index
    %c0_1 = arith.constant 0 : index
    %0 = vector.load %arg2[%c0, %c0_0, %c0_1] : memref<1x8x8xf32, #tpu.memory_space<vmem>>, vector<1x8x8xf32>
    %1 = vector.shape_cast %0 : vector<1x8x8xf32> to vector<8x8xf32>
    %c0_2 = arith.constant 0 : index
    %c0_3 = arith.constant 0 : index
    %2 = vector.load %arg6[%c0_2, %c0_3] : memref<8x30xf32, #tpu.memory_space<vmem>>, vector<8x30xf32>
    %cst = arith.constant dense<0.000000e+00> : vector<8x30xf32>
    %3 = tpu.matmul %1, %2, %cst {dimension_numbers = #tpu.dot_dimension_numbers<[1], [0], [0], [1], [0, 0, 1, 1], [], []>} : vector<8x8xf32>, vector<8x30xf32>, vector<8x30xf32> -> vector<8x30xf32>
    %c0_4 = arith.constant 0 : index
    %c0_5 = arith.constant 0 : index
    %4 = vector.load %arg5[%c0_4, %c0_5] : memref<20x8xf32, #tpu.memory_space<vmem>>, vector<20x8xf32>
    %cst_6 = arith.constant dense<0.000000e+00> : vector<20x30xf32>
    %5 = tpu.matmul %4, %3, %cst_6 {dimension_numbers = #tpu.dot_dimension_numbers<[1], [0], [0], [1], [0, 0, 1, 1], [], []>} : vector<20x8xf32>, vector<8x30xf32>, vector<20x30xf32> -> vector<20x30xf32>
    %c0_7 = arith.constant 0 : index
    %c0_8 = arith.constant 0 : index
    %c0_9 = arith.constant 0 : index
    %6 = vector.load %arg4[%c0_7, %c0_8, %c0_9] : memref<1x20x30xi8, #tpu.memory_space<vmem>>, vector<1x20x30xi8>
    %7 = vector.shape_cast %6 : vector<1x20x30xi8> to vector<20x30xi8>
    %c0_i8 = arith.constant 0 : i8
    %8 = vector.broadcast %c0_i8 : i8 to vector<20x30xi8>
    %9 = arith.cmpi ne, %7, %8 : vector<20x30xi8>
    %c0_10 = arith.constant 0 : index
    %c0_11 = arith.constant 0 : index
    %c0_12 = arith.constant 0 : index
    %10 = vector.load %arg3[%c0_10, %c0_11, %c0_12] : memref<1x20x30xf32, #tpu.memory_space<vmem>>, vector<1x20x30xf32>
    %11 = vector.shape_cast %10 : vector<1x20x30xf32> to vector<20x30xf32>
    %cst_13 = arith.constant 1.000000e+00 : f32
    %12 = vector.broadcast %cst_13 : f32 to vector<20x30xf32>
    %13 = arith.select %9, %11, %12 : vector<20x30xi1>, vector<20x30xf32>
    %cst_14 = arith.constant 1.000000e+00 : f32
    %14 = vector.broadcast %cst_14 : f32 to vector<20x30xf32>
    %15 = arith.select %9, %5, %14 : vector<20x30xi1>, vector<20x30xf32>
    %16 = arith.divf %13, %15 : vector<20x30xf32>
    %17 = math.log %16 : vector<20x30xf32>
    %cst_15 = arith.constant dense<0.000000e+00> : vector<30xf32>
    %18 = vector.multi_reduction <add>, %17, %cst_15 [0] : vector<20x30xf32> to vector<30xf32>
    %19 = vector.shape_cast %18 : vector<30xf32> to vector<1x30xf32>
    %c0_16 = arith.constant 0 : index
    %c0_17 = arith.constant 0 : index
    %c0_18 = arith.constant 0 : index
    %c0_19 = arith.constant 0 : index
    %20 = vector.load %arg7[%c0_16, %c0_17, %c0_18, %c0_19] : memref<1x1x3x30xf32, #tpu.memory_space<vmem>>, vector<1x1x1x30xf32>
    %21 = vector.shape_cast %20 : vector<1x1x1x30xf32> to vector<1x30xf32>
    %22 = vector.shape_cast %19 : vector<1x30xf32> to vector<1x1x1x30xf32>
    tpu.vector_store %arg7[%c0_16, %c0_17, %c0_18, %c0_19], %22 {strides = array<i32>} : memref<1x1x3x30xf32, #tpu.memory_space<vmem>>, vector<1x1x1x30xf32>,
    %23 = arith.mulf %17, %17 : vector<20x30xf32>
    %cst_20 = arith.constant dense<0.000000e+00> : vector<30xf32>
    %24 = vector.multi_reduction <add>, %23, %cst_20 [0] : vector<20x30xf32> to vector<30xf32>
    %25 = vector.shape_cast %24 : vector<30xf32> to vector<1x30xf32>
    %c0_21 = arith.constant 0 : index
    %c0_22 = arith.constant 0 : index
    %c1 = arith.constant 1 : index
    %c0_23 = arith.constant 0 : index
    %26 = vector.load %arg7[%c0_21, %c0_22, %c1, %c0_23] : memref<1x1x3x30xf32, #tpu.memory_space<vmem>>, vector<1x1x1x30xf32>
    %27 = vector.shape_cast %26 : vector<1x1x1x30xf32> to vector<1x30xf32>
    %28 = vector.shape_cast %25 : vector<1x30xf32> to vector<1x1x1x30xf32>
    tpu.vector_store %arg7[%c0_21, %c0_22, %c1, %c0_23], %28 {strides = array<i32>} : memref<1x1x3x30xf32, #tpu.memory_space<vmem>>, vector<1x1x1x30xf32>,
    %29 = arith.extui %9 : vector<20x30xi1> to vector<20x30xi32>
    %30 = arith.sitofp %29 : vector<20x30xi32> to vector<20x30xf32>
    %cst_24 = arith.constant dense<0.000000e+00> : vector<30xf32>
    %31 = vector.multi_reduction <add>, %30, %cst_24 [0] : vector<20x30xf32> to vector<30xf32>
    %32 = vector.shape_cast %31 : vector<30xf32> to vector<1x30xf32>
    %c0_25 = arith.constant 0 : index
    %c0_26 = arith.constant 0 : index
    %c2 = arith.constant 2 : index
    %c0_27 = arith.constant 0 : index
    %33 = vector.load %arg7[%c0_25, %c0_26, %c2, %c0_27] : memref<1x1x3x30xf32, #tpu.memory_space<vmem>>, vector<1x1x1x30xf32>
    %34 = vector.shape_cast %33 : vector<1x1x1x30xf32> to vector<1x30xf32>
    %35 = vector.shape_cast %32 : vector<1x30xf32> to vector<1x1x1x30xf32>
    tpu.vector_store %arg7[%c0_25, %c0_26, %c2, %c0_27], %35 {strides = array<i32>} : memref<1x1x3x30xf32, #tpu.memory_space<vmem>>, vector<1x1x1x30xf32>,
    return
  }
  func.func @transform_0(%arg0: i32, %arg1: i32) -> (i32, i32, i32) {
    %c0_i32 = arith.constant 0 : i32
    %c0_i32_0 = arith.constant 0 : i32
    %c0_i32_1 = arith.constant 0 : i32
    return %arg0, %c0_i32, %c0_i32_0 : i32, i32, i32
  }
  func.func @transform_1(%arg0: i32, %arg1: i32) -> (i32, i32, i32) {
    %c0_i32 = arith.constant 0 : i32
    %c0_i32_0 = arith.constant 0 : i32
    return %arg0, %arg1, %c0_i32 : i32, i32, i32
  }
  func.func @transform_2(%arg0: i32, %arg1: i32) -> (i32, i32, i32) {
    %c0_i32 = arith.constant 0 : i32
    %c0_i32_0 = arith.constant 0 : i32
    return %arg0, %arg1, %c0_i32 : i32, i32, i32
  }
  func.func @transform_3(%arg0: i32, %arg1: i32) -> (i32, i32) {
    %c0_i32 = arith.constant 0 : i32
    %c0_i32_0 = arith.constant 0 : i32
    return %arg1, %c0_i32 : i32, i32
  }
  func.func @transform_4(%arg0: i32, %arg1: i32) -> (i32, i32) {
    %c0_i32 = arith.constant 0 : i32
    %c0_i32_0 = arith.constant 0 : i32
    %c0_i32_1 = arith.constant 0 : i32
    return %c0_i32, %c0_i32_0 : i32, i32
  }
  func.func @transform_5(%arg0: i32, %arg1: i32) -> (i32, i32, i32, i32) {
    %c0_i32 = arith.constant 0 : i32
    %c0_i32_0 = arith.constant 0 : i32
    %c0_i32_1 = arith.constant 0 : i32
    return %arg0, %arg1, %c0_i32, %c0_i32_0 : i32, i32, i32, i32
  }
}

</mosaic_0001>

<llo_original>
// kernel: tpu_custom_call.1
$region0: #{tpu_custom_call.1}
  #allocation0 [shape = 'u32[]', space=smem, size = 0x4, offset = 0x4, fixed_abs, tag = 'smem constant byte address 0x4 - core index']
  #allocation1 [shape = 'u32[72,128]{1,0:T(1,128)}', space=vmem, size = 0x9000, scoped, tag = 'internal scratch']
  %s0 = inlined_call_operand.vmem [shape: f32[2,8,8], index: 0, kind: input, shape index: {}]
  %s1 = inlined_call_operand.vmem [shape: f32[2,20,30], index: 1, kind: input, shape index: {}]
  %s2 = inlined_call_operand.vmem [shape: s8[2,20,30], index: 2, kind: input, shape index: {}]
  %s3 = inlined_call_operand.vmem [shape: f32[20,8], index: 3, kind: input, shape index: {}]
  %s4 = inlined_call_operand.vmem [shape: f32[8,30], index: 4, kind: input, shape index: {}]
  %s5 = inlined_call_operand.vmem [shape: f32[2,1,3,30], index: 5, kind: output, shape index: {}]
  %s6 = sld [smem:[#allocation0]]
  $region53: #{tpu_custom_call.1} parent=0
    _
  %s8 = ssub.s32 1, %s6
  %s9 = scalar_select 0, %s8, %s6
  loop: start=0, step=1, limit=4
  $region2: #{tpu_custom_call.1} parent=0 // loop_pre_header
    _
  $region3: #{tpu_custom_call.1} parent=0 // loop_header
    %s11 = sphi 0, %s15
    %p12 = scmp.ge.s32.totalorder %s11, 4
    %s18 = sphi 0, %s30
    %s19 = sphi 0, %s26
    %s20 = sphi 0, %s18
    %s21 = sphi 0, %s19
    %s22 = sphi 0, %s20
    %s23 = sphi 0, %s21
    %s33 = sphi 0, %s35
    %s36 = sphi 0, %s33
    %s37 = sphi 0, %s36
    %s53 = sphi 0, %s37
    %s61 = sphi 0, %s63
    %s64 = sphi 0, %s61
    %s65 = sphi 0, %s64
    %s81 = sphi 0, %s65
    %s89 = sphi 0, %s91
    %s92 = sphi 0, %s89
    %s93 = sphi 0, %s92
    %s109 = sphi 0, %s93
    %s115 = sphi 0, %s117
    %s118 = sphi 0, %s115
    %s119 = sphi 0, %s118
    %s135 = sphi 0, %s119
    %s139 = sphi 0, %s139
    %s141 = sphi 0, %s139
    %s142 = sphi 0, %s141
    %s156 = sphi 0, %s142
    %s164 = sphi 0, %s166
    %s167 = sphi 0, %s164
    %s168 = sphi 0, %s167
    %s184 = sphi 0, %s168
  $region4: #{tpu_custom_call.1} parent=0 // loop_header_branch
    %14 = sbr.rel (%p12) target = $region8
  $region5: #{tpu_custom_call.1} parent=0 // loop_body
    %s16 = ssub.s32 %s11, 1
    %s17 = ssub.s32 %s11, 2
    %s24 = sadd.s32 1, %s19
    %p25 = scmp.ge.s32.totalorder %s24, 1
    %s26 = scalar_select %p25, 0, %s24
    %s27 = sadd.s32 1, %s18
    %s28 = scalar_select %p25, %s27, %s18
    %p29 = scmp.ge.s32.totalorder %s28, 2
    %s30 = scalar_select %p29, 0, %s28
    %s31 = ssub.s32 %s18, %s30
    %p32 = scmp.eq.s32.totalorder %s31, 0
    %s34 = sadd.s32 %s33, 1
    %s35 = scalar_select %p32, %s33, %s34
    %p38 = pneg %p32
    %p39 = scmp.eq.s32.totalorder %s11, 1
    %p40 = por %p38, %p39
    %p41 = scmp.ne.s32.totalorder %s33, %s36
    %p42 = scmp.eq.s32.totalorder %s11, 0
    %p43 = por %p41, %p42
    %p44 = scmp.ne.s32.totalorder %s33, %s36
    %p45 = scmp.eq.s32.totalorder %s16, 1
    %p46 = por %p44, %p45
    %p47 = scmp.ne.s32.totalorder %s36, %s37
    %p48 = scmp.eq.s32.totalorder %s16, 0
    %p49 = por %p47, %p48
    %p50 = scmp.ne.s32.totalorder %s36, %s37
    %p51 = scmp.eq.s32.totalorder %s17, 1
    %p52 = por %p50, %p51
    %p54 = scmp.ne.s32.totalorder %s37, %s53
    %p55 = scmp.eq.s32.totalorder %s17, 0
    %p56 = por %p54, %p55
    %s57 = ssub.s32 %s18, %s30
    %s58 = ssub.s32 %s19, %s26
    %s59 = sor.u32 %s57, %s58
    %p60 = scmp.eq.s32.totalorder %s59, 0
    %s62 = sadd.s32 %s61, 1
    %s63 = scalar_select %p60, %s61, %s62
    %p66 = pneg %p60
    %p67 = scmp.eq.s32.totalorder %s11, 1
    %p68 = por %p66, %p67
    %p69 = scmp.ne.s32.totalorder %s61, %s64
    %p70 = scmp.eq.s32.totalorder %s11, 0
    %p71 = por %p69, %p70
    %p72 = scmp.ne.s32.totalorder %s61, %s64
    %p73 = scmp.eq.s32.totalorder %s16, 1
    %p74 = por %p72, %p73
    %p75 = scmp.ne.s32.totalorder %s64, %s65
    %p76 = scmp.eq.s32.totalorder %s16, 0
    %p77 = por %p75, %p76
    %p78 = scmp.ne.s32.totalorder %s64, %s65
    %p79 = scmp.eq.s32.totalorder %s17, 1
    %p80 = por %p78, %p79
    %p82 = scmp.ne.s32.totalorder %s65, %s81
    %p83 = scmp.eq.s32.totalorder %s17, 0
    %p84 = por %p82, %p83
    %s85 = ssub.s32 %s18, %s30
    %s86 = ssub.s32 %s19, %s26
    %s87 = sor.u32 %s85, %s86
    %p88 = scmp.eq.s32.totalorder %s87, 0
    %s90 = sadd.s32 %s89, 1
    %s91 = scalar_select %p88, %s89, %s90
    %p94 = pneg %p88
    %p95 = scmp.eq.s32.totalorder %s11, 1
    %p96 = por %p94, %p95
    %p97 = scmp.ne.s32.totalorder %s89, %s92
    %p98 = scmp.eq.s32.totalorder %s11, 0
    %p99 = por %p97, %p98
    %p100 = scmp.ne.s32.totalorder %s89, %s92
    %p101 = scmp.eq.s32.totalorder %s16, 1
    %p102 = por %p100, %p101
    %p103 = scmp.ne.s32.totalorder %s92, %s93
    %p104 = scmp.eq.s32.totalorder %s16, 0
    %p105 = por %p103, %p104
    %p106 = scmp.ne.s32.totalorder %s92, %s93
    %p107 = scmp.eq.s32.totalorder %s17, 1
    %p108 = por %p106, %p107
    %p110 = scmp.ne.s32.totalorder %s93, %s109
    %p111 = scmp.eq.s32.totalorder %s17, 0
    %p112 = por %p110, %p111
    %s113 = ssub.s32 %s19, %s26
    %p114 = scmp.eq.s32.totalorder %s113, 0
    %s116 = sadd.s32 %s115, 1
    %s117 = scalar_select %p114, %s115, %s116
    %p120 = pneg %p114
    %p121 = scmp.eq.s32.totalorder %s11, 1
    %p122 = por %p120, %p121
    %p123 = scmp.ne.s32.totalorder %s115, %s118
    %p124 = scmp.eq.s32.totalorder %s11, 0
    %p125 = por %p123, %p124
    %p126 = scmp.ne.s32.totalorder %s115, %s118
    %p127 = scmp.eq.s32.totalorder %s16, 1
    %p128 = por %p126, %p127
    %p129 = scmp.ne.s32.totalorder %s118, %s119
    %p130 = scmp.eq.s32.totalorder %s16, 0
    %p131 = por %p129, %p130
    %p132 = scmp.ne.s32.totalorder %s118, %s119
    %p133 = scmp.eq.s32.totalorder %s17, 1
    %p134 = por %p132, %p133
    %p136 = scmp.ne.s32.totalorder %s119, %s135
    %p137 = scmp.eq.s32.totalorder %s17, 0
    %p138 = por %p136, %p137
    %s140 = sadd.s32 %s139, 1
    %p143 = scmp.eq.s32.totalorder %s11, 1
    %p144 = scmp.ne.s32.totalorder %s139, %s141
    %p145 = scmp.eq.s32.totalorder %s11, 0
    %p146 = por %p144, %p145
    %p147 = scmp.ne.s32.totalorder %s139, %s141
    %p148 = scmp.eq.s32.totalorder %s16, 1
    %p149 = por %p147, %p148
    %p150 = scmp.ne.s32.totalorder %s141, %s142
    %p151 = scmp.eq.s32.totalorder %s16, 0
    %p152 = por %p150, %p151
    %p153 = scmp.ne.s32.totalorder %s141, %s142
    %p154 = scmp.eq.s32.totalorder %s17, 1
    %p155 = por %p153, %p154
    %p157 = scmp.ne.s32.totalorder %s142, %s156
    %p158 = scmp.eq.s32.totalorder %s17, 0
    %p159 = por %p157, %p158
    %s160 = ssub.s32 %s18, %s30
    %s161 = ssub.s32 %s19, %s26
    %s162 = sor.u32 %s160, %s161
    %p163 = scmp.eq.s32.totalorder %s162, 0
    %s165 = sadd.s32 %s164, 1
    %s166 = scalar_select %p163, %s164, %s165
    %p169 = pneg %p163
    %p170 = scmp.eq.s32.totalorder %s11, 1
    %p171 = por %p169, %p170
    %p172 = scmp.ne.s32.totalorder %s164, %s167
    %p173 = scmp.eq.s32.totalorder %s11, 0
    %p174 = por %p172, %p173
    %p175 = scmp.ne.s32.totalorder %s164, %s167
    %p176 = scmp.eq.s32.totalorder %s16, 1
    %p177 = por %p175, %p176
    %p178 = scmp.ne.s32.totalorder %s167, %s168
    %p179 = scmp.eq.s32.totalorder %s16, 0
    %p180 = por %p178, %p179
    %p181 = scmp.ne.s32.totalorder %s167, %s168
    %p182 = scmp.eq.s32.totalorder %s17, 1
    %p183 = por %p181, %p182
    %p185 = scmp.ne.s32.totalorder %s168, %s184
    %p186 = scmp.eq.s32.totalorder %s17, 0
    %p187 = por %p185, %p186
    %p188 = scmp.le.s32.totalorder 1, %s11
    %p189 = scmp.lt.s32.totalorder %s11, 3
    %p190 = pnand %p188, %p189
    %p191 = pneg %p190
    // Predicated region
    $region9: #{tpu_custom_call.1} parent=5 // pred_check
      _
    $region10: #{tpu_custom_call.1} parent=5 // pred_check_branch
      %193 = sbr.rel (%p190) target = $region12
    $region11: #{tpu_custom_call.1} parent=5 // pred_region
      %s194 = ssub.s32 %s11, 1
      // Predicated region
      $region13: #{tpu_custom_call.1} parent=11 // pred_check
        %p195 = pneg %p131
      $region14: #{tpu_custom_call.1} parent=11 // pred_check_branch
        %197 = sbr.rel (%p195) target = $region16
      $region15: #{tpu_custom_call.1} parent=11 // pred_region
        %s198 = smul.u32 3, %s21
        %p199 = scmp.lt.s32.totalorder %s198, 2
        %s200 = scalar_select %p199, %s198, 2
        %s201 = smul.addr %s200, 8
        %s202 = scalar_lea.vmem %s3, %s201
        %s203 = smul.u32 3, %s21
      $region16: #{tpu_custom_call.1} parent=11 // pred_fallthru
        _
      // Predicated region
      $region17: #{tpu_custom_call.1} parent=11 // pred_check
        %p204 = pneg %p152
      $region18: #{tpu_custom_call.1} parent=11 // pred_check_branch
        %206 = sbr.rel (%p204) target = $region20
      $region19: #{tpu_custom_call.1} parent=11 // pred_region
        _
      $region20: #{tpu_custom_call.1} parent=11 // pred_fallthru
        _
    $region12: #{tpu_custom_call.1} parent=5 // pred_fallthru
      _
    %p207 = scmp.lt.s32.totalorder %s11, 2
    // Predicated region
    $region21: #{tpu_custom_call.1} parent=5 // pred_check
      %p208 = pneg %p207
    $region22: #{tpu_custom_call.1} parent=5 // pred_check_branch
      %210 = sbr.rel (%p208) target = $region24
    $region23: #{tpu_custom_call.1} parent=5 // pred_region
      // Predicated region
      $region25: #{tpu_custom_call.1} parent=23 // pred_check
        %p211 = pneg %p43
      $region26: #{tpu_custom_call.1} parent=23 // pred_check_branch
        %213 = sbr.rel (%p211) target = $region28
      $region27: #{tpu_custom_call.1} parent=23 // pred_region
        %p214 = scmp.lt.s32.totalorder %s18, 1
        %s215 = scalar_select %p214, %s18, 1
        %s216 = smul.addr %s215, 8
        %s217 = scalar_lea.vmem %s0, %s216
      $region28: #{tpu_custom_call.1} parent=23 // pred_fallthru
        _
      // Predicated region
      $region29: #{tpu_custom_call.1} parent=23 // pred_check
        %p218 = pneg %p71
      $region30: #{tpu_custom_call.1} parent=23 // pred_check_branch
        %220 = sbr.rel (%p218) target = $region32
      $region31: #{tpu_custom_call.1} parent=23 // pred_region
        %s221 = smul.u32 3, %s19
        %p222 = scmp.lt.s32.totalorder %s18, 1
        %s223 = scalar_select %p222, %s18, 1
        %p224 = scmp.lt.s32.totalorder %s221, 2
        %s225 = scalar_select %p224, %s221, 2
        %s226 = smul.addr %s223, 3
        %s227 = sadd.s32 %s225, %s226
        %s228 = smul.addr %s227, 8
        %s229 = scalar_lea.vmem %s1, %s228
        %s230 = smul.u32 3, %s19
      $region32: #{tpu_custom_call.1} parent=23 // pred_fallthru
        _
      // Predicated region
      $region33: #{tpu_custom_call.1} parent=23 // pred_check
        %p231 = pneg %p99
      $region34: #{tpu_custom_call.1} parent=23 // pred_check_branch
        %233 = sbr.rel (%p231) target = $region36
      $region35: #{tpu_custom_call.1} parent=23 // pred_region
        %s234 = smul.u32 3, %s19
        %p235 = scmp.lt.s32.totalorder %s18, 1
        %s236 = scalar_select %p235, %s18, 1
        %p237 = scmp.lt.s32.totalorder %s234, 2
        %s238 = scalar_select %p237, %s234, 2
        %s239 = smul.addr %s236, 3
        %s240 = sadd.s32 %s238, %s239
        %s241 = smul.addr %s240, 2
        %s242 = scalar_lea.vmem %s2, %s241
        %s243 = smul.u32 3, %s19
      $region36: #{tpu_custom_call.1} parent=23 // pred_fallthru
        _
    $region24: #{tpu_custom_call.1} parent=5 // pred_fallthru
      _
    %p244 = scmp.le.s32.totalorder 1, %s11
    %p245 = scmp.lt.s32.totalorder %s11, 3
    %p246 = pnand %p244, %p245
    %p247 = pneg %p246
    // Predicated region
    $region37: #{tpu_custom_call.1} parent=5 // pred_check
      _
    $region38: #{tpu_custom_call.1} parent=5 // pred_check_branch
      %249 = sbr.rel (%p246) target = $region40
    $region39: #{tpu_custom_call.1} parent=5 // pred_region
      %s250 = ssub.s32 %s11, 1
      %p251 = scmp.lt.s32.totalorder %s20, 1
      %s252 = scalar_select %p251, %s20, 1
      %s253 = smul.addr %s252, 8
      %s254 = scalar_lea.vmem %s0, %s253
      %p255 = pneg %p49
      %p256 = pneg %p46
      %s257 = smul.u32 3, %s21
      %p258 = scmp.lt.s32.totalorder %s20, 1
      %s259 = scalar_select %p258, %s20, 1
      %p260 = scmp.lt.s32.totalorder %s257, 2
      %s261 = scalar_select %p260, %s257, 2
      %s262 = smul.addr %s259, 3
      %s263 = sadd.s32 %s261, %s262
      %s264 = smul.addr %s263, 8
      %s265 = scalar_lea.vmem %s1, %s264
      %p266 = pneg %p77
      %p267 = pneg %p74
      %s268 = smul.u32 3, %s21
      %p269 = scmp.lt.s32.totalorder %s20, 1
      %s270 = scalar_select %p269, %s20, 1
      %p271 = scmp.lt.s32.totalorder %s268, 2
      %s272 = scalar_select %p271, %s268, 2
      %s273 = smul.addr %s270, 3
      %s274 = sadd.s32 %s272, %s273
      %s275 = smul.addr %s274, 2
      %s276 = scalar_lea.vmem %s2, %s275
      %p277 = pneg %p105
      %p278 = pneg %p102
      %s279 = smul.u32 3, %s21
      %p280 = scmp.lt.s32.totalorder %s279, 2
      %s281 = scalar_select %p280, %s279, 2
      %s282 = smul.addr %s281, 8
      %s283 = scalar_lea.vmem %s3, %s282
      %p284 = pneg %p131
      %p285 = pneg %p128
      %p286 = pneg %p152
      %p287 = pneg %p149
      %p288 = pneg %p180
      %p289 = pneg %p177
      %p290 = scmp.lt.s32.totalorder %s20, 1
      %s291 = scalar_select %p290, %s20, 1
      %p292 = scmp.lt.s32.totalorder %s21, 0
      %s293 = scalar_select %p292, %s21, 0
      %s294 = sadd.s32 %s293, %s291
      %s295 = smul.addr %s294, 4
      %s296 = scalar_lea.vmem %s5, %s295
      %p297 = scmp.lt.s32.totalorder %s20, 1
      %s298 = scalar_select %p297, %s20, 1
      %s299 = smul.addr %s298, 8
      %s300 = scalar_lea.vmem %s0, %s299
      %s301 = smul.u32 3, %s21
      %p302 = scmp.lt.s32.totalorder %s20, 1
      %s303 = scalar_select %p302, %s20, 1
      %p304 = scmp.lt.s32.totalorder %s301, 2
      %s305 = scalar_select %p304, %s301, 2
      %s306 = smul.addr %s303, 3
      %s307 = sadd.s32 %s305, %s306
      %s308 = smul.addr %s307, 8
      %s309 = scalar_lea.vmem %s1, %s308
      %s310 = smul.u32 3, %s21
      %s311 = smul.u32 3, %s21
      %p312 = scmp.lt.s32.totalorder %s20, 1
      %s313 = scalar_select %p312, %s20, 1
      %p314 = scmp.lt.s32.totalorder %s311, 2
      %s315 = scalar_select %p314, %s311, 2
      %s316 = smul.addr %s313, 3
      %s317 = sadd.s32 %s315, %s316
      %s318 = smul.addr %s317, 2
      %s319 = scalar_lea.vmem %s2, %s318
      %s320 = smul.u32 3, %s21
      %s321 = smul.u32 3, %s21
      %p322 = scmp.lt.s32.totalorder %s321, 2
      %s323 = scalar_select %p322, %s321, 2
      %s324 = smul.addr %s323, 8
      %s325 = scalar_lea.vmem %s3, %s324
      %s326 = smul.u32 3, %s21
      %p327 = scmp.lt.s32.totalorder %s20, 1
      %s328 = scalar_select %p327, %s20, 1
      %p329 = scmp.lt.s32.totalorder %s21, 0
      %s330 = scalar_select %p329, %s21, 0
      %s331 = sadd.s32 %s330, %s328
      %s332 = smul.addr %s331, 4
      %s333 = scalar_lea.vmem %s5, %s332
      %v336 = vld [vmem:[%s300] sm:$0xff]
      %v337 = vld [vmem:[%s4] sm:$0xff]
      %vm338 = vcmask 64512
      %v340 = vsel %vm338, %v336, 0
      %342 = vmatpush.msra.mxu0 0.0
      %343 = vmatpush.msra.mxu0 0.0
      %344 = vmatpush.msra.mxu0 0.0
      %345 = vmatpush.msra.mxu0 0.0
      %346 = vmatpush.msra.mxu0 0.0
      %347 = vmatpush.msra.mxu0 0.0
      %348 = vmatpush.msra.mxu0 0.0
      %349 = vmatpush.msra.mxu0 0.0
      %350 = vmatpush.msra.mxu0 0.0
      %351 = vmatpush.msra.mxu0 0.0
      %352 = vmatpush.msra.mxu0 0.0
      %353 = vmatpush.msra.mxu0 0.0
      %354 = vmatpush.msra.mxu0 0.0
      %355 = vmatpush.msra.mxu0 0.0
      %356 = vmatpush.msra.mxu0 0.0
      %357 = vmatpush.msra.mxu0 %v337
      %358 = vmatmul.f32.gmra.mxu0 %v340
      %v359 = vpop.f32.mrf.mxu0
      %v360 = vadd.f32 0.0, %v359
      %361 = vdwg.mxu0
      %v362 = vld [vmem:[%s325] sm:$0xff]
      %v363 = vld [vmem:[%s325 + $0x8] sm:$0xff]
      %v364 = vld [vmem:[%s325 + $0x10] sm:$0xf]
      %v366 = vsel %vm338, %v362, 0
      %v369 = vsel %vm338, %v363, 0
      %v372 = vsel %vm338, %v364, 0
      %374 = vmatpush.msra.mxu0 0.0
      %375 = vmatpush.msra.mxu0 0.0
      %376 = vmatpush.msra.mxu0 0.0
      %377 = vmatpush.msra.mxu0 0.0
      %378 = vmatpush.msra.mxu0 0.0
      %379 = vmatpush.msra.mxu0 0.0
      %380 = vmatpush.msra.mxu0 0.0
      %381 = vmatpush.msra.mxu0 0.0
      %382 = vmatpush.msra.mxu0 0.0
      %383 = vmatpush.msra.mxu0 0.0
      %384 = vmatpush.msra.mxu0 0.0
      %385 = vmatpush.msra.mxu0 0.0
      %386 = vmatpush.msra.mxu0 0.0
      %387 = vmatpush.msra.mxu0 0.0
      %388 = vmatpush.msra.mxu0 0.0
      %389 = vmatpush.msra.mxu0 %v360
      %390 = vmatmul.f32.gmra.mxu0 %v366
      %v391 = vpop.f32.mrf.mxu0
      %v392 = vadd.f32 0.0, %v391
      %393 = vmatmul.f32.gmra.mxu0 %v369
      %v394 = vpop.f32.mrf.mxu0
      %v395 = vadd.f32 0.0, %v394
      %396 = vmatmul.f32.gmra.mxu0 %v372
      %v397 = vpop.f32.mrf.mxu0
      %v398 = vadd.f32 0.0, %v397
      %399 = vdwg.mxu0
      %v400 = vld [vmem:[%s319] sm:$0x3]
      %v401 = vld [vmem:[%s319 + $0x2] sm:$0x3]
      %v402 = vld [vmem:[%s319 + $0x4] sm:$0x1]
      %vm403 = vnez %v400
      %vm404 = vnez %v401
      %vm405 = vnez %v402
      %v406 = vld [vmem:[%s309] sm:$0xff]
      %v407 = vld [vmem:[%s309 + $0x8] sm:$0xff]
      %v408 = vld [vmem:[%s309 + $0x10] sm:$0xf]
      %v409 = vsel %vm403, 16843009, 0
      %v410 = vsel %vm404, 16843009, 0
      %v411 = vsel %vm405, 16843009, 0
      %v412 = vunpack.c.0.s8 %v409
      %v413 = vunpack.c.0.s8 %v410
      %v414 = vunpack.c.0.s8 %v411
      %vm415 = vcmp.ne.s32.totalorder %v412, 0
      %vm416 = vcmp.ne.s32.totalorder %v413, 0
      %vm417 = vcmp.ne.s32.totalorder %v414, 0
      %v418 = vsel %vm415, %v406, 1.0
      %v419 = vsel %vm416, %v407, 1.0
      %v420 = vsel %vm417, %v408, 1.0
      %v421 = vsel %vm415, %v392, 1.0
      %v422 = vsel %vm416, %v395, 1.0
      %v423 = vsel %vm417, %v398, 1.0
      %v424 = vrcp.pop %v421
      %v425 = vmul.f32 %v421, %v424
      %v426 = vsub.f32 1.0, %v425
      %v427 = vmul.f32 %v424, %v426
      %v428 = vadd.f32 %v424, %v427
      %vm429 = vweird.f32 %v421
      %vm430 = vweird.f32 %v424
      %vm431 = vmor %vm429, %vm430
      %v432 = vsel %vm431, %v424, %v428
      %v433 = vand.u32 2147483647, %v421
      %vm434 = vcmp.eq.f32.partialorder %v433, 8.507059e+37
      %v435 = vand.u32 %v421, 2147483648
      %v436 = vor.u32 1.1754944e-38, %v435
      %v437 = vsel %vm434, %v436, %v432
      %v438 = vmul.f32 %v418, %v437
      %v439 = vrcp.pop %v422
      %v440 = vmul.f32 %v422, %v439
      %v441 = vsub.f32 1.0, %v440
      %v442 = vmul.f32 %v439, %v441
      %v443 = vadd.f32 %v439, %v442
      %vm444 = vweird.f32 %v422
      %vm445 = vweird.f32 %v439
      %vm446 = vmor %vm444, %vm445
      %v447 = vsel %vm446, %v439, %v443
      %v448 = vand.u32 2147483647, %v422
      %vm449 = vcmp.eq.f32.partialorder %v448, 8.507059e+37
      %v450 = vand.u32 %v422, 2147483648
      %v451 = vor.u32 1.1754944e-38, %v450
      %v452 = vsel %vm449, %v451, %v447
      %v453 = vmul.f32 %v419, %v452
      %v454 = vrcp.pop %v423
      %v455 = vmul.f32 %v423, %v454
      %v456 = vsub.f32 1.0, %v455
      %v457 = vmul.f32 %v454, %v456
      %v458 = vadd.f32 %v454, %v457
      %vm459 = vweird.f32 %v423
      %vm460 = vweird.f32 %v454
      %vm461 = vmor %vm459, %vm460
      %v462 = vsel %vm461, %v454, %v458
      %v463 = vand.u32 2147483647, %v423
      %vm464 = vcmp.eq.f32.partialorder %v463, 8.507059e+37
      %v465 = vand.u32 %v423, 2147483648
      %v466 = vor.u32 1.1754944e-38, %v465
      %v467 = vsel %vm464, %v466, %v462
      %v468 = vmul.f32 %v420, %v467
      %v469 = vlog2.pop %v438
      %v470 = vmul.f32 %v469, 0.6931472
      %v471 = vlog2.pop %v453
      %v472 = vmul.f32 %v471, 0.6931472
      %v473 = vlog2.pop %v468
      %v474 = vmul.f32 %v473, 0.6931472
      %vm475 = vcmask 244736
      %v476 = vsel %vm475, %v470, 0.0
      %v477 = vsel %vm475, %v472, 0.0
      %v478 = vadd.f32 %v476, %v477
      %vm479 = vcmask 240640
      %v480 = vsel %vm479, %v474, 0.0
      %v481 = vadd.f32 %v478, %v480
      %v482 = vrot.slane %v481, 4
      %v483 = vadd.f32 %v481, %v482
      %v484 = vrot.slane %v483, 2
      %v485 = vadd.f32 %v483, %v484
      %v486 = vrot.slane %v485, 1
      %v487 = vadd.f32 %v485, %v486
      %vm488 = vcmask 237568
      %489 = vst.msk [vmem:[%s333] sm:$0x1] %vm488, %v487
      %v490 = vmul.f32 %v470, %v470
      %v491 = vmul.f32 %v472, %v472
      %v492 = vmul.f32 %v474, %v474
      %v493 = vsel %vm475, %v490, 0.0
      %v494 = vsel %vm475, %v491, 0.0
      %v495 = vadd.f32 %v493, %v494
      %v496 = vsel %vm479, %v492, 0.0
      %v497 = vadd.f32 %v495, %v496
      %v498 = vrot.slane %v497, 4
      %v499 = vadd.f32 %v497, %v498
      %v500 = vrot.slane %v499, 2
      %v501 = vadd.f32 %v499, %v500
      %v502 = vrot.slane %v501, 1
      %v503 = vadd.f32 %v501, %v502
      %504 = vst.msk [vmem:[%s333 + $0x1] sm:$0x1] %vm488, %v503
      %v505 = vsel %vm415, 1, 0
      %v506 = vsel %vm416, 1, 0
      %v507 = vsel %vm417, 1, 0
      %v508 = vcvt.s32.f32 %v505
      %v509 = vcvt.s32.f32 %v506
      %v510 = vcvt.s32.f32 %v507
      %v511 = vsel %vm475, %v508, 0.0
      %v512 = vsel %vm475, %v509, 0.0
      %v513 = vadd.f32 %v511, %v512
      %v514 = vsel %vm479, %v510, 0.0
      %v515 = vadd.f32 %v513, %v514
      %v516 = vrot.slane %v515, 4
      %v517 = vadd.f32 %v515, %v516
      %v518 = vrot.slane %v517, 2
      %v519 = vadd.f32 %v517, %v518
      %v520 = vrot.slane %v519, 1
      %v521 = vadd.f32 %v519, %v520
      %522 = vst.msk [vmem:[%s333 + $0x2] sm:$0x1] %vm488, %v521
      %p523 = scmp.lt.s32.totalorder %s20, 1
      %s524 = scalar_select %p523, %s20, 1
      %p525 = scmp.lt.s32.totalorder %s21, 0
      %s526 = scalar_select %p525, %s21, 0
      %s527 = sadd.s32 %s526, %s524
      %s528 = smul.addr %s527, 4
      %s529 = scalar_lea.vmem %s5, %s528
      // Predicated region
      $region41: #{tpu_custom_call.1} parent=39 // pred_check
        %p530 = pneg %p177
      $region42: #{tpu_custom_call.1} parent=39 // pred_check_branch
        %532 = sbr.rel (%p530) target = $region44
      $region43: #{tpu_custom_call.1} parent=39 // pred_region
        _
      $region44: #{tpu_custom_call.1} parent=39 // pred_fallthru
        _
    $region40: #{tpu_custom_call.1} parent=5 // pred_fallthru
      _
    %p533 = scmp.le.s32.totalorder 2, %s11
    // Predicated region
    $region45: #{tpu_custom_call.1} parent=5 // pred_check
      %p534 = pneg %p533
    $region46: #{tpu_custom_call.1} parent=5 // pred_check_branch
      %536 = sbr.rel (%p534) target = $region48
    $region47: #{tpu_custom_call.1} parent=5 // pred_region
      %s537 = ssub.s32 %s11, 2
      // Predicated region
      $region49: #{tpu_custom_call.1} parent=47 // pred_check
        %p538 = pneg %p183
      $region50: #{tpu_custom_call.1} parent=47 // pred_check_branch
        %540 = sbr.rel (%p538) target = $region52
      $region51: #{tpu_custom_call.1} parent=47 // pred_region
        %p541 = scmp.lt.s32.totalorder %s22, 1
        %s542 = scalar_select %p541, %s22, 1
        %p543 = scmp.lt.s32.totalorder %s23, 0
        %s544 = scalar_select %p543, %s23, 0
        %s545 = sadd.s32 %s544, %s542
        %s546 = smul.addr %s545, 4
        %s547 = scalar_lea.vmem %s5, %s546
      $region52: #{tpu_custom_call.1} parent=47 // pred_fallthru
        _
    $region48: #{tpu_custom_call.1} parent=5 // pred_fallthru
      _
  $region6: #{tpu_custom_call.1} parent=0 // loop_footer
    %s15 = sadd.s32 1, %s11
  $region7: #{tpu_custom_call.1} parent=0 // loop_footer_branch
    %10 = sbr.rel target = $region3
  $region8: #{tpu_custom_call.1} parent=0 // loop_exit
    _

</llo_original>
